<compile_context>
chip_gen: v7x
topology: tpu7x:2x2x1
jax: 0.10.0
libtpu: 0.0.40
codegen_flags: <defaults>
</compile_context>

<pallas_src>
import jax
import jax.numpy as jnp
from jax.experimental import pallas as pl
from jax.experimental.pallas import tpu as pltpu


def _spectral_modes_kernel(xr_ref, xi_ref, wr_ref, wd_ref, ws_ref, out_ref):
    # Block shapes:
    #   xr/xi : (TM, B, Cin)
    #   wr/wd/ws : (TM, Cin, Cout)   (wr, wi-wr, wr+wi)
    #   out   : (TM, B, 2*Cout)      ([real | imag] packed on the lane axis)
    xr = xr_ref[...]
    xi = xi_ref[...]
    wr = wr_ref[...]
    wd = wd_ref[...]
    ws = ws_ref[...]

    # Gauss 3-multiply complex matmul:
    #   k1 = (xr + xi) @ wr
    #   k2 = xr @ (wi - wr)
    #   k3 = xi @ (wr + wi)
    #   real = k1 - k3 ;  imag = k1 + k2
    k1 = jnp.einsum('mbi,mio->mbo', xr + xi, wr,
                    preferred_element_type=jnp.float32)
    k2 = jnp.einsum('mbi,mio->mbo', xr, wd,
                    preferred_element_type=jnp.float32)
    k3 = jnp.einsum('mbi,mio->mbo', xi, ws,
                    preferred_element_type=jnp.float32)

    real = k1 - k3
    imag = k1 + k2
    out_ref[...] = jnp.concatenate([real, imag], axis=-1)


def _pick_block_modes(M, B, Cin, Cout, vmem_budget_bytes=24 * 1024 * 1024):
    """Largest mode-block that divides M, fits the VMEM budget (double-buffered),
    and leaves >= 2 grid steps when possible (so both v7x TensorCores get work)."""
    bytes_per_mode = 4 * (2 * B * Cin + 3 * Cin * Cout + B * 2 * Cout)
    max_tm_vmem = max(1, vmem_budget_bytes // (2 * bytes_per_mode))
    divisors = [d for d in range(1, M + 1) if M % d == 0 and d <= max_tm_vmem]
    if not divisors:
        return 1
    multi_step = [d for d in divisors if M // d >= 2]
    return max(multi_step) if multi_step else max(divisors)


def _compl_mul1d_pallas(xr, xi, wr, wd, ws):
    """xr, xi: (M, B, Cin); wr, wd, ws: (M, Cin, Cout) -> (M, B, 2*Cout)."""
    M, B, Cin = xr.shape
    Cout = wr.shape[2]
    tm = _pick_block_modes(M, B, Cin, Cout)
    grid = (M // tm,)

    x_spec = pl.BlockSpec((tm, B, Cin), lambda m: (m, 0, 0))
    w_spec = pl.BlockSpec((tm, Cin, Cout), lambda m: (m, 0, 0))
    o_spec = pl.BlockSpec((tm, B, 2 * Cout), lambda m: (m, 0, 0))

    return pl.pallas_call(
        _spectral_modes_kernel,
        out_shape=jax.ShapeDtypeStruct((M, B, 2 * Cout), jnp.float32),
        grid_spec=pltpu.PrefetchScalarGridSpec(
            num_scalar_prefetch=0,
            grid=grid,
            in_specs=[x_spec, x_spec, w_spec, w_spec, w_spec],
            out_specs=o_spec,
        ),
        compiler_params=pltpu.CompilerParams(
            dimension_semantics=("parallel",)),
    )(xr, xi, wr, wd, ws)


def prepare_spectral_weights(w_real, w_imag):
    """One-time (init-time) weight prep: transpose to mode-major layout and
    precompute the Gauss-trick combinations (wr, wi - wr, wr + wi)."""
    wr = jnp.transpose(w_real, (2, 0, 1)).astype(jnp.float32)   # (M, Cin, Cout)
    wi = jnp.transpose(w_imag, (2, 0, 1)).astype(jnp.float32)   # (M, Cin, Cout)
    return wr, wi - wr, wr + wi


def spectral_conv1d(x, prepared_weights, modes1):
    """Forward pass of SpectralConv1d.

    x                : (B, Cin, N) float32   (PyTorch NCW layout)
    prepared_weights : output of prepare_spectral_weights (M, Cin, Cout) x 3
    returns          : (B, Cout, N) float32
    """
    wr, wd, ws = prepared_weights
    B, Cin, N = x.shape
    M, _, Cout = wr.shape
    n_freq = N // 2 + 1

    # FFT glue (no Pallas equivalent for FFT).
    x_ft = jnp.fft.rfft(x.astype(jnp.float32), axis=-1)          # (B, Cin, n_freq)
    # Single complex transpose to mode-major, then split real/imag.
    x_modes = jnp.transpose(x_ft[:, :, :modes1], (2, 0, 1))      # (M, B, Cin)
    xr = jnp.real(x_modes).astype(jnp.float32)
    xi = jnp.imag(x_modes).astype(jnp.float32)

    out_cat = _compl_mul1d_pallas(xr, xi, wr, wd, ws)            # (M, B, 2*Cout)
    out_modes = jax.lax.complex(out_cat[..., :Cout], out_cat[..., Cout:])
    out_modes = jnp.transpose(out_modes, (1, 2, 0))              # (B, Cout, M)

    # Zero-pad the unused high frequencies (no zeros+scatter round-trip).
    out_ft = jnp.pad(out_modes, ((0, 0), (0, 0), (0, n_freq - modes1)))
    y = jnp.fft.irfft(out_ft, n=N, axis=-1)                      # (B, Cout, N)
    return y.astype(jnp.float32)


def _reference(x, w_real, w_imag, modes1):
    """Pure-JAX reference mirroring the PyTorch forward exactly."""
    B, Cin, N = x.shape
    Cout = w_real.shape[1]
    w = (w_real + 1j * w_imag).astype(jnp.complex64)
    x_ft = jnp.fft.rfft(x, axis=-1)
    out_modes = jnp.einsum('bix,iox->box', x_ft[:, :, :modes1], w)
    out_ft = jnp.zeros((B, Cout, N // 2 + 1), dtype=jnp.complex64)
    out_ft = out_ft.at[:, :, :modes1].set(out_modes)
    return jnp.fft.irfft(out_ft, n=N, axis=-1)


if __name__ == "__main__":
    # Small shapes consistent with the module.
    B, Cin, Cout, N, modes1 = 2, 4, 4, 16, 8

    key = jax.random.PRNGKey(0)
    kx, kwr, kwi = jax.random.split(key, 3)

    # Deterministic parameter init: scale * uniform[0,1) for real and imag parts
    # (mirrors scale * torch.rand(..., dtype=cfloat)).
    scale = 1.0 / (Cin * Cout)
    w_real = scale * jax.random.uniform(kwr, (Cin, Cout, modes1), dtype=jnp.float32)
    w_imag = scale * jax.random.uniform(kwi, (Cin, Cout, modes1), dtype=jnp.float32)

    x = jax.random.normal(kx, (B, Cin, N), dtype=jnp.float32)

    # Weight prep happens once, outside the hot path.
    prep = jax.block_until_ready(prepare_spectral_weights(w_real, w_imag))

    fwd = jax.jit(spectral_conv1d, static_argnums=2)
    y = jax.block_until_ready(fwd(x, prep, modes1))

    y_ref = jax.block_until_ready(_reference(x, w_real, w_imag, modes1))
    assert y.shape == (B, Cout, N)
    assert jnp.allclose(y, y_ref, rtol=1e-4, atol=1e-4), "mismatch vs reference"

    print("KERNEL_OK")
</pallas_src>

<mosaic_0001>
module attributes {stable_mosaic.version = 11 : i64} {
  func.func @_spectral_modes_kernel(%arg0: i32, %arg1: memref<4x2x4xf32, #tpu.memory_space<vmem>>, %arg2: memref<4x2x4xf32, #tpu.memory_space<vmem>>, %arg3: memref<4x4x4xf32, #tpu.memory_space<vmem>>, %arg4: memref<4x4x4xf32, #tpu.memory_space<vmem>>, %arg5: memref<4x4x4xf32, #tpu.memory_space<vmem>>, %arg6: memref<4x2x8xf32, #tpu.memory_space<vmem>>) attributes {dimension_semantics = [#tpu.dimension_semantics<parallel>], iteration_bounds = array<i64: 2>, scalar_prefetch = 0 : i64, scratch_operands = 0 : i64, tpu.core_type = #tpu.core_type<tc>, window_params = [{transform_indices = @transform_0, window_bounds = array<i64: 4, 2, 4>}, {transform_indices = @transform_1, window_bounds = array<i64: 4, 2, 4>}, {transform_indices = @transform_2, window_bounds = array<i64: 4, 4, 4>}, {transform_indices = @transform_3, window_bounds = array<i64: 4, 4, 4>}, {transform_indices = @transform_4, window_bounds = array<i64: 4, 4, 4>}, {transform_indices = @transform_5, window_bounds = array<i64: 4, 2, 8>}]} {
    %c0 = arith.constant 0 : index
    %c0_0 = arith.constant 0 : index
    %c0_1 = arith.constant 0 : index
    %0 = vector.load %arg1[%c0, %c0_0, %c0_1] : memref<4x2x4xf32, #tpu.memory_space<vmem>>, vector<4x2x4xf32>
    %c0_2 = arith.constant 0 : index
    %c0_3 = arith.constant 0 : index
    %c0_4 = arith.constant 0 : index
    %1 = vector.load %arg2[%c0_2, %c0_3, %c0_4] : memref<4x2x4xf32, #tpu.memory_space<vmem>>, vector<4x2x4xf32>
    %c0_5 = arith.constant 0 : index
    %c0_6 = arith.constant 0 : index
    %c0_7 = arith.constant 0 : index
    %2 = vector.load %arg3[%c0_5, %c0_6, %c0_7] : memref<4x4x4xf32, #tpu.memory_space<vmem>>, vector<4x4x4xf32>
    %c0_8 = arith.constant 0 : index
    %c0_9 = arith.constant 0 : index
    %c0_10 = arith.constant 0 : index
    %3 = vector.load %arg4[%c0_8, %c0_9, %c0_10] : memref<4x4x4xf32, #tpu.memory_space<vmem>>, vector<4x4x4xf32>
    %c0_11 = arith.constant 0 : index
    %c0_12 = arith.constant 0 : index
    %c0_13 = arith.constant 0 : index
    %4 = vector.load %arg5[%c0_11, %c0_12, %c0_13] : memref<4x4x4xf32, #tpu.memory_space<vmem>>, vector<4x4x4xf32>
    %5 = arith.addf %0, %1 : vector<4x2x4xf32>
    "tpu.trace_start"() <{level = 10 : i32, message = "mbi,mio->mbo"}> : () -> ()
    %cst = arith.constant dense<0.000000e+00> : vector<4x2x4xf32>
    %6 = tpu.matmul %5, %2, %cst {dimension_numbers = #tpu.dot_dimension_numbers<[2], [1], [1], [2], [0, 0, 0, 1, 1, 2], [0], [0]>} : vector<4x2x4xf32>, vector<4x4x4xf32>, vector<4x2x4xf32> -> vector<4x2x4xf32>
    %cst_14 = arith.constant dense<0.000000e+00> : vector<4x2x4xf32>
    %7 = tpu.matmul %0, %3, %cst_14 {dimension_numbers = #tpu.dot_dimension_numbers<[2], [1], [1], [2], [0, 0, 0, 1, 1, 2], [0], [0]>} : vector<4x2x4xf32>, vector<4x4x4xf32>, vector<4x2x4xf32> -> vector<4x2x4xf32>
    %cst_15 = arith.constant dense<0.000000e+00> : vector<4x2x4xf32>
    %8 = tpu.matmul %1, %4, %cst_15 {dimension_numbers = #tpu.dot_dimension_numbers<[2], [1], [1], [2], [0, 0, 0, 1, 1, 2], [0], [0]>} : vector<4x2x4xf32>, vector<4x4x4xf32>, vector<4x2x4xf32> -> vector<4x2x4xf32>
    "tpu.trace_stop"() : () -> ()
    %9 = arith.subf %6, %8 : vector<4x2x4xf32>
    %10 = arith.addf %6, %7 : vector<4x2x4xf32>
    %11 = tpu.concatenate %9, %10 in 2 : vector<4x2x4xf32>, vector<4x2x4xf32> -> vector<4x2x8xf32>
    %c0_16 = arith.constant 0 : index
    %c0_17 = arith.constant 0 : index
    %c0_18 = arith.constant 0 : index
    %12 = vector.load %arg6[%c0_16, %c0_17, %c0_18] : memref<4x2x8xf32, #tpu.memory_space<vmem>>, vector<4x2x8xf32>
    tpu.vector_store %arg6[%c0_16, %c0_17, %c0_18], %11 {strides = array<i32>} : memref<4x2x8xf32, #tpu.memory_space<vmem>>, vector<4x2x8xf32>,
    return
  }
  func.func @transform_0(%arg0: i32) -> (i32, i32, i32) {
    %c0_i32 = arith.constant 0 : i32
    %c0_i32_0 = arith.constant 0 : i32
    %c0_i32_1 = arith.constant 0 : i32
    return %arg0, %c0_i32, %c0_i32_0 : i32, i32, i32
  }
  func.func @transform_1(%arg0: i32) -> (i32, i32, i32) {
    %c0_i32 = arith.constant 0 : i32
    %c0_i32_0 = arith.constant 0 : i32
    %c0_i32_1 = arith.constant 0 : i32
    return %arg0, %c0_i32, %c0_i32_0 : i32, i32, i32
  }
  func.func @transform_2(%arg0: i32) -> (i32, i32, i32) {
    %c0_i32 = arith.constant 0 : i32
    %c0_i32_0 = arith.constant 0 : i32
    %c0_i32_1 = arith.constant 0 : i32
    return %arg0, %c0_i32, %c0_i32_0 : i32, i32, i32
  }
  func.func @transform_3(%arg0: i32) -> (i32, i32, i32) {
    %c0_i32 = arith.constant 0 : i32
    %c0_i32_0 = arith.constant 0 : i32
    %c0_i32_1 = arith.constant 0 : i32
    return %arg0, %c0_i32, %c0_i32_0 : i32, i32, i32
  }
  func.func @transform_4(%arg0: i32) -> (i32, i32, i32) {
    %c0_i32 = arith.constant 0 : i32
    %c0_i32_0 = arith.constant 0 : i32
    %c0_i32_1 = arith.constant 0 : i32
    return %arg0, %c0_i32, %c0_i32_0 : i32, i32, i32
  }
  func.func @transform_5(%arg0: i32) -> (i32, i32, i32) {
    %c0_i32 = arith.constant 0 : i32
    %c0_i32_0 = arith.constant 0 : i32
    %c0_i32_1 = arith.constant 0 : i32
    return %arg0, %c0_i32, %c0_i32_0 : i32, i32, i32
  }
}

</mosaic_0001>

<llo_original>
// kernel: reverse.1
$region0: #{reverse.1}
  #allocation0 [shape = 's32[1]{0}', space=sflag, size = 0x4, scoped, tag = 'scoped memory for reverse.1']
  %s0 = inlined_call_operand.vmem [shape: f32[2,4,7], index: 0, kind: input, shape index: {}]
  %s1 = inlined_call_operand.vmem [shape: f32[2,4,7], index: 1, kind: output, shape index: {}]
  %s2 = scalar_lea.vmem %s0, 12
  %v3 = vld [vmem:[%s2] sm:$0x3]
  %4 = vst [vmem:[%s1] sm:$0x3] %v3
  %s5 = scalar_lea.vmem %s0, 10
  %v6 = vld [vmem:[%s5] sm:$0x3]
  %s7 = scalar_lea.vmem %s1, 2
  %8 = vst [vmem:[%s7] sm:$0x3] %v6
  %s9 = scalar_lea.vmem %s0, 8
  %v10 = vld [vmem:[%s9] sm:$0x3]
  %s11 = scalar_lea.vmem %s1, 4
  %12 = vst [vmem:[%s11] sm:$0x3] %v10
  %s13 = scalar_lea.vmem %s0, 6
  %v14 = vld [vmem:[%s13] sm:$0x3]
  %s15 = scalar_lea.vmem %s1, 6
  %16 = vst [vmem:[%s15] sm:$0x3] %v14
  %s17 = scalar_lea.vmem %s0, 4
  %v18 = vld [vmem:[%s17] sm:$0x3]
  %s19 = scalar_lea.vmem %s1, 8
  %20 = vst [vmem:[%s19] sm:$0x3] %v18
  %s21 = scalar_lea.vmem %s0, 2
  %v22 = vld [vmem:[%s21] sm:$0x3]
  %s23 = scalar_lea.vmem %s1, 10
  %24 = vst [vmem:[%s23] sm:$0x3] %v22
  %v25 = vld [vmem:[%s0] sm:$0x3]
  %s26 = scalar_lea.vmem %s1, 12
  %27 = vst [vmem:[%s26] sm:$0x3] %v25

// kernel: spectral_conv1d.1
$region0: #{spectral_conv1d.1}
  #allocation0 [shape = 'u32[]', space=smem, size = 0x4, offset = 0x4, fixed_abs, tag = 'smem constant byte address 0x4 - core index']
  #allocation1 [shape = 'u32[144,128]{1,0:T(1,128)}', space=vmem, size = 0x12000, scoped, tag = 'internal scratch']
  %s0 = inlined_call_operand.vmem [shape: f32[8,2,4], index: 0, kind: input, shape index: {}]
  %s1 = inlined_call_operand.vmem [shape: f32[8,2,4], index: 1, kind: input, shape index: {}]
  %s2 = inlined_call_operand.vmem [shape: f32[8,4,4], index: 2, kind: input, shape index: {}]
  %s3 = inlined_call_operand.vmem [shape: f32[8,4,4], index: 3, kind: input, shape index: {}]
  %s4 = inlined_call_operand.vmem [shape: f32[8,4,4], index: 4, kind: input, shape index: {}]
  %s5 = inlined_call_operand.vmem [shape: f32[8,2,8], index: 5, kind: output, shape index: {}]
  %s6 = sld [smem:[#allocation0]]
  $region53: #{spectral_conv1d.1} parent=0
    _
  %s8 = ssub.s32 1, %s6
  %s9 = scalar_select 0, %s8, %s6
  loop: start=0, step=1, limit=4
  $region2: #{spectral_conv1d.1} parent=0 // loop_pre_header
    _
  $region3: #{spectral_conv1d.1} parent=0 // loop_header
    %s11 = sphi 0, %s15
    %p12 = scmp.ge.s32.totalorder %s11, 4
    %s21 = sphi 0, %s23
    %s24 = sphi 0, %s21
    %s25 = sphi 0, %s24
    %s41 = sphi 0, %s25
    %s47 = sphi 0, %s49
    %s50 = sphi 0, %s47
    %s51 = sphi 0, %s50
    %s67 = sphi 0, %s51
    %s73 = sphi 0, %s75
    %s76 = sphi 0, %s73
    %s77 = sphi 0, %s76
    %s93 = sphi 0, %s77
    %s99 = sphi 0, %s101
    %s102 = sphi 0, %s99
    %s103 = sphi 0, %s102
    %s119 = sphi 0, %s103
    %s125 = sphi 0, %s127
    %s128 = sphi 0, %s125
    %s129 = sphi 0, %s128
    %s145 = sphi 0, %s129
    %s151 = sphi 0, %s153
    %s154 = sphi 0, %s151
    %s155 = sphi 0, %s154
    %s171 = sphi 0, %s155
  $region4: #{spectral_conv1d.1} parent=0 // loop_header_branch
    %14 = sbr.rel (%p12) target = $region8
  $region5: #{spectral_conv1d.1} parent=0 // loop_body
    %s16 = ssub.s32 %s11, 1
    %s17 = ssub.s32 %s11, 2
    %s18 = sadd.s32 %s11, 1
    %s19 = ssub.s32 %s11, %s18
    %p20 = scmp.eq.s32.totalorder %s19, 0
    %s22 = sadd.s32 %s21, 1
    %s23 = scalar_select %p20, %s21, %s22
    %p26 = pneg %p20
    %p27 = scmp.eq.s32.totalorder %s11, 1
    %p28 = por %p26, %p27
    %p29 = scmp.ne.s32.totalorder %s21, %s24
    %p30 = scmp.eq.s32.totalorder %s11, 0
    %p31 = por %p29, %p30
    %p32 = scmp.ne.s32.totalorder %s21, %s24
    %p33 = scmp.eq.s32.totalorder %s16, 1
    %p34 = por %p32, %p33
    %p35 = scmp.ne.s32.totalorder %s24, %s25
    %p36 = scmp.eq.s32.totalorder %s16, 0
    %p37 = por %p35, %p36
    %p38 = scmp.ne.s32.totalorder %s24, %s25
    %p39 = scmp.eq.s32.totalorder %s17, 1
    %p40 = por %p38, %p39
    %p42 = scmp.ne.s32.totalorder %s25, %s41
    %p43 = scmp.eq.s32.totalorder %s17, 0
    %p44 = por %p42, %p43
    %s45 = ssub.s32 %s11, %s18
    %p46 = scmp.eq.s32.totalorder %s45, 0
    %s48 = sadd.s32 %s47, 1
    %s49 = scalar_select %p46, %s47, %s48
    %p52 = pneg %p46
    %p53 = scmp.eq.s32.totalorder %s11, 1
    %p54 = por %p52, %p53
    %p55 = scmp.ne.s32.totalorder %s47, %s50
    %p56 = scmp.eq.s32.totalorder %s11, 0
    %p57 = por %p55, %p56
    %p58 = scmp.ne.s32.totalorder %s47, %s50
    %p59 = scmp.eq.s32.totalorder %s16, 1
    %p60 = por %p58, %p59
    %p61 = scmp.ne.s32.totalorder %s50, %s51
    %p62 = scmp.eq.s32.totalorder %s16, 0
    %p63 = por %p61, %p62
    %p64 = scmp.ne.s32.totalorder %s50, %s51
    %p65 = scmp.eq.s32.totalorder %s17, 1
    %p66 = por %p64, %p65
    %p68 = scmp.ne.s32.totalorder %s51, %s67
    %p69 = scmp.eq.s32.totalorder %s17, 0
    %p70 = por %p68, %p69
    %s71 = ssub.s32 %s11, %s18
    %p72 = scmp.eq.s32.totalorder %s71, 0
    %s74 = sadd.s32 %s73, 1
    %s75 = scalar_select %p72, %s73, %s74
    %p78 = pneg %p72
    %p79 = scmp.eq.s32.totalorder %s11, 1
    %p80 = por %p78, %p79
    %p81 = scmp.ne.s32.totalorder %s73, %s76
    %p82 = scmp.eq.s32.totalorder %s11, 0
    %p83 = por %p81, %p82
    %p84 = scmp.ne.s32.totalorder %s73, %s76
    %p85 = scmp.eq.s32.totalorder %s16, 1
    %p86 = por %p84, %p85
    %p87 = scmp.ne.s32.totalorder %s76, %s77
    %p88 = scmp.eq.s32.totalorder %s16, 0
    %p89 = por %p87, %p88
    %p90 = scmp.ne.s32.totalorder %s76, %s77
    %p91 = scmp.eq.s32.totalorder %s17, 1
    %p92 = por %p90, %p91
    %p94 = scmp.ne.s32.totalorder %s77, %s93
    %p95 = scmp.eq.s32.totalorder %s17, 0
    %p96 = por %p94, %p95
    %s97 = ssub.s32 %s11, %s18
    %p98 = scmp.eq.s32.totalorder %s97, 0
    %s100 = sadd.s32 %s99, 1
    %s101 = scalar_select %p98, %s99, %s100
    %p104 = pneg %p98
    %p105 = scmp.eq.s32.totalorder %s11, 1
    %p106 = por %p104, %p105
    %p107 = scmp.ne.s32.totalorder %s99, %s102
    %p108 = scmp.eq.s32.totalorder %s11, 0
    %p109 = por %p107, %p108
    %p110 = scmp.ne.s32.totalorder %s99, %s102
    %p111 = scmp.eq.s32.totalorder %s16, 1
    %p112 = por %p110, %p111
    %p113 = scmp.ne.s32.totalorder %s102, %s103
    %p114 = scmp.eq.s32.totalorder %s16, 0
    %p115 = por %p113, %p114
    %p116 = scmp.ne.s32.totalorder %s102, %s103
    %p117 = scmp.eq.s32.totalorder %s17, 1
    %p118 = por %p116, %p117
    %p120 = scmp.ne.s32.totalorder %s103, %s119
    %p121 = scmp.eq.s32.totalorder %s17, 0
    %p122 = por %p120, %p121
    %s123 = ssub.s32 %s11, %s18
    %p124 = scmp.eq.s32.totalorder %s123, 0
    %s126 = sadd.s32 %s125, 1
    %s127 = scalar_select %p124, %s125, %s126
    %p130 = pneg %p124
    %p131 = scmp.eq.s32.totalorder %s11, 1
    %p132 = por %p130, %p131
    %p133 = scmp.ne.s32.totalorder %s125, %s128
    %p134 = scmp.eq.s32.totalorder %s11, 0
    %p135 = por %p133, %p134
    %p136 = scmp.ne.s32.totalorder %s125, %s128
    %p137 = scmp.eq.s32.totalorder %s16, 1
    %p138 = por %p136, %p137
    %p139 = scmp.ne.s32.totalorder %s128, %s129
    %p140 = scmp.eq.s32.totalorder %s16, 0
    %p141 = por %p139, %p140
    %p142 = scmp.ne.s32.totalorder %s128, %s129
    %p143 = scmp.eq.s32.totalorder %s17, 1
    %p144 = por %p142, %p143
    %p146 = scmp.ne.s32.totalorder %s129, %s145
    %p147 = scmp.eq.s32.totalorder %s17, 0
    %p148 = por %p146, %p147
    %s149 = ssub.s32 %s11, %s18
    %p150 = scmp.eq.s32.totalorder %s149, 0
    %s152 = sadd.s32 %s151, 1
    %s153 = scalar_select %p150, %s151, %s152
    %p156 = pneg %p150
    %p157 = scmp.eq.s32.totalorder %s11, 1
    %p158 = por %p156, %p157
    %p159 = scmp.ne.s32.totalorder %s151, %s154
    %p160 = scmp.eq.s32.totalorder %s11, 0
    %p161 = por %p159, %p160
    %p162 = scmp.ne.s32.totalorder %s151, %s154
    %p163 = scmp.eq.s32.totalorder %s16, 1
    %p164 = por %p162, %p163
    %p165 = scmp.ne.s32.totalorder %s154, %s155
    %p166 = scmp.eq.s32.totalorder %s16, 0
    %p167 = por %p165, %p166
    %p168 = scmp.ne.s32.totalorder %s154, %s155
    %p169 = scmp.eq.s32.totalorder %s17, 1
    %p170 = por %p168, %p169
    %p172 = scmp.ne.s32.totalorder %s155, %s171
    %p173 = scmp.eq.s32.totalorder %s17, 0
    %p174 = por %p172, %p173
    %p175 = scmp.le.s32.totalorder 1, %s11
    %p176 = scmp.lt.s32.totalorder %s11, 3
    %p177 = pnand %p175, %p176
    %p178 = pneg %p177
    // Predicated region
    $region9: #{spectral_conv1d.1} parent=5 // pred_check
      _
    $region10: #{spectral_conv1d.1} parent=5 // pred_check_branch
      %180 = sbr.rel (%p177) target = $region12
    $region11: #{spectral_conv1d.1} parent=5 // pred_region
      %s181 = ssub.s32 %s11, 1
    $region12: #{spectral_conv1d.1} parent=5 // pred_fallthru
      _
    %p182 = scmp.lt.s32.totalorder %s11, 2
    // Predicated region
    $region13: #{spectral_conv1d.1} parent=5 // pred_check
      %p183 = pneg %p182
    $region14: #{spectral_conv1d.1} parent=5 // pred_check_branch
      %185 = sbr.rel (%p183) target = $region16
    $region15: #{spectral_conv1d.1} parent=5 // pred_region
      // Predicated region
      $region17: #{spectral_conv1d.1} parent=15 // pred_check
        %p186 = pneg %p31
      $region18: #{spectral_conv1d.1} parent=15 // pred_check_branch
        %188 = sbr.rel (%p186) target = $region20
      $region19: #{spectral_conv1d.1} parent=15 // pred_region
        %s189 = smul.u32 4, %s11
        %p190 = scmp.lt.s32.totalorder %s189, 7
        %s191 = scalar_select %p190, %s189, 7
        %s192 = smul.addr %s191, 2
        %s193 = scalar_lea.vmem %s0, %s192
        %s194 = smul.u32 4, %s11
      $region20: #{spectral_conv1d.1} parent=15 // pred_fallthru
        _
      // Predicated region
      $region21: #{spectral_conv1d.1} parent=15 // pred_check
        %p195 = pneg %p57
      $region22: #{spectral_conv1d.1} parent=15 // pred_check_branch
        %197 = sbr.rel (%p195) target = $region24
      $region23: #{spectral_conv1d.1} parent=15 // pred_region
        %s198 = smul.u32 4, %s11
        %p199 = scmp.lt.s32.totalorder %s198, 7
        %s200 = scalar_select %p199, %s198, 7
        %s201 = smul.addr %s200, 2
        %s202 = scalar_lea.vmem %s1, %s201
        %s203 = smul.u32 4, %s11
      $region24: #{spectral_conv1d.1} parent=15 // pred_fallthru
        _
      // Predicated region
      $region25: #{spectral_conv1d.1} parent=15 // pred_check
        %p204 = pneg %p83
      $region26: #{spectral_conv1d.1} parent=15 // pred_check_branch
        %206 = sbr.rel (%p204) target = $region28
      $region27: #{spectral_conv1d.1} parent=15 // pred_region
        %s207 = smul.u32 4, %s11
        %p208 = scmp.lt.s32.totalorder %s207, 7
        %s209 = scalar_select %p208, %s207, 7
        %s210 = smul.addr %s209, 4
        %s211 = scalar_lea.vmem %s2, %s210
        %s212 = smul.u32 4, %s11
      $region28: #{spectral_conv1d.1} parent=15 // pred_fallthru
        _
      // Predicated region
      $region29: #{spectral_conv1d.1} parent=15 // pred_check
        %p213 = pneg %p109
      $region30: #{spectral_conv1d.1} parent=15 // pred_check_branch
        %215 = sbr.rel (%p213) target = $region32
      $region31: #{spectral_conv1d.1} parent=15 // pred_region
        %s216 = smul.u32 4, %s11
        %p217 = scmp.lt.s32.totalorder %s216, 7
        %s218 = scalar_select %p217, %s216, 7
        %s219 = smul.addr %s218, 4
        %s220 = scalar_lea.vmem %s3, %s219
        %s221 = smul.u32 4, %s11
      $region32: #{spectral_conv1d.1} parent=15 // pred_fallthru
        _
      // Predicated region
      $region33: #{spectral_conv1d.1} parent=15 // pred_check
        %p222 = pneg %p135
      $region34: #{spectral_conv1d.1} parent=15 // pred_check_branch
        %224 = sbr.rel (%p222) target = $region36
      $region35: #{spectral_conv1d.1} parent=15 // pred_region
        %s225 = smul.u32 4, %s11
        %p226 = scmp.lt.s32.totalorder %s225, 7
        %s227 = scalar_select %p226, %s225, 7
        %s228 = smul.addr %s227, 4
        %s229 = scalar_lea.vmem %s4, %s228
        %s230 = smul.u32 4, %s11
      $region36: #{spectral_conv1d.1} parent=15 // pred_fallthru
        _
    $region16: #{spectral_conv1d.1} parent=5 // pred_fallthru
      _
    %p231 = scmp.le.s32.totalorder 1, %s11
    %p232 = scmp.lt.s32.totalorder %s11, 3
    %p233 = pnand %p231, %p232
    %p234 = pneg %p233
    // Predicated region
    $region37: #{spectral_conv1d.1} parent=5 // pred_check
      _
    $region38: #{spectral_conv1d.1} parent=5 // pred_check_branch
      %236 = sbr.rel (%p233) target = $region40
    $region39: #{spectral_conv1d.1} parent=5 // pred_region
      %s237 = ssub.s32 %s11, 1
      %s238 = smul.u32 4, %s16
      %p239 = scmp.lt.s32.totalorder %s238, 7
      %s240 = scalar_select %p239, %s238, 7
      %s241 = smul.addr %s240, 2
      %s242 = scalar_lea.vmem %s0, %s241
      %p243 = pneg %p37
      %p244 = pneg %p34
      %s245 = smul.u32 4, %s16
      %p246 = scmp.lt.s32.totalorder %s245, 7
      %s247 = scalar_select %p246, %s245, 7
      %s248 = smul.addr %s247, 2
      %s249 = scalar_lea.vmem %s1, %s248
      %p250 = pneg %p63
      %p251 = pneg %p60
      %s252 = smul.u32 4, %s16
      %p253 = scmp.lt.s32.totalorder %s252, 7
      %s254 = scalar_select %p253, %s252, 7
      %s255 = smul.addr %s254, 4
      %s256 = scalar_lea.vmem %s2, %s255
      %p257 = pneg %p89
      %p258 = pneg %p86
      %s259 = smul.u32 4, %s16
      %p260 = scmp.lt.s32.totalorder %s259, 7
      %s261 = scalar_select %p260, %s259, 7
      %s262 = smul.addr %s261, 4
      %s263 = scalar_lea.vmem %s3, %s262
      %p264 = pneg %p115
      %p265 = pneg %p112
      %s266 = smul.u32 4, %s16
      %p267 = scmp.lt.s32.totalorder %s266, 7
      %s268 = scalar_select %p267, %s266, 7
      %s269 = smul.addr %s268, 4
      %s270 = scalar_lea.vmem %s4, %s269
      %p271 = pneg %p141
      %p272 = pneg %p138
      %p273 = pneg %p167
      %p274 = pneg %p164
      %s275 = smul.u32 4, %s16
      %p276 = scmp.lt.s32.totalorder %s275, 7
      %s277 = scalar_select %p276, %s275, 7
      %s278 = smul.addr %s277, 2
      %s279 = scalar_lea.vmem %s5, %s278
      %s280 = smul.u32 4, %s16
      %p281 = scmp.lt.s32.totalorder %s280, 7
      %s282 = scalar_select %p281, %s280, 7
      %s283 = smul.addr %s282, 2
      %s284 = scalar_lea.vmem %s0, %s283
      %s285 = smul.u32 4, %s16
      %s286 = smul.u32 4, %s16
      %p287 = scmp.lt.s32.totalorder %s286, 7
      %s288 = scalar_select %p287, %s286, 7
      %s289 = smul.addr %s288, 2
      %s290 = scalar_lea.vmem %s1, %s289
      %s291 = smul.u32 4, %s16
      %s292 = smul.u32 4, %s16
      %p293 = scmp.lt.s32.totalorder %s292, 7
      %s294 = scalar_select %p293, %s292, 7
      %s295 = smul.addr %s294, 4
      %s296 = scalar_lea.vmem %s2, %s295
      %s297 = smul.u32 4, %s16
      %s298 = smul.u32 4, %s16
      %p299 = scmp.lt.s32.totalorder %s298, 7
      %s300 = scalar_select %p299, %s298, 7
      %s301 = smul.addr %s300, 4
      %s302 = scalar_lea.vmem %s3, %s301
      %s303 = smul.u32 4, %s16
      %s304 = smul.u32 4, %s16
      %p305 = scmp.lt.s32.totalorder %s304, 7
      %s306 = scalar_select %p305, %s304, 7
      %s307 = smul.addr %s306, 4
      %s308 = scalar_lea.vmem %s4, %s307
      %s309 = smul.u32 4, %s16
      %s310 = smul.u32 4, %s16
      %p311 = scmp.lt.s32.totalorder %s310, 7
      %s312 = scalar_select %p311, %s310, 7
      %s313 = smul.addr %s312, 2
      %s314 = scalar_lea.vmem %s5, %s313
      %s315 = smul.u32 4, %s16
      %v316 = vld [vmem:[%s284] sm:$0x3]
      %v317 = vld [vmem:[%s284 + $0x2] sm:$0x3]
      %v318 = vld [vmem:[%s284 + $0x4] sm:$0x3]
      %v319 = vld [vmem:[%s284 + $0x6] sm:$0x3]
      %v320 = vld [vmem:[%s290] sm:$0x3]
      %v321 = vld [vmem:[%s290 + $0x2] sm:$0x3]
      %v322 = vld [vmem:[%s290 + $0x4] sm:$0x3]
      %v323 = vld [vmem:[%s290 + $0x6] sm:$0x3]
      %v324 = vld [vmem:[%s296] sm:$0xf]
      %v325 = vld [vmem:[%s296 + $0x4] sm:$0xf]
      %v326 = vld [vmem:[%s296 + $0x8] sm:$0xf]
      %v327 = vld [vmem:[%s296 + $0xc] sm:$0xf]
      %v328 = vld [vmem:[%s302] sm:$0xf]
      %v329 = vld [vmem:[%s302 + $0x4] sm:$0xf]
      %v330 = vld [vmem:[%s302 + $0x8] sm:$0xf]
      %v331 = vld [vmem:[%s302 + $0xc] sm:$0xf]
      %v332 = vld [vmem:[%s308] sm:$0xf]
      %v333 = vld [vmem:[%s308 + $0x4] sm:$0xf]
      %v334 = vld [vmem:[%s308 + $0x8] sm:$0xf]
      %v335 = vld [vmem:[%s308 + $0xc] sm:$0xf]
      %v336 = vadd.f32 %v316, %v320
      %v337 = vadd.f32 %v317, %v321
      %v338 = vadd.f32 %v318, %v322
      %v339 = vadd.f32 %v319, %v323
      %vm340 = vcmask 31744
      %v342 = vsel %vm340, %v336, 0
      %vm344 = vcmask 1043456
      %v346 = vsel %vm344, %v324, 0
      %348 = vmatprep.subr.mxu0 0.0
      %349 = vmatpush1.msra.mxu0 %v346
      %350 = vmatprep.subr.mxu0 0.0
      %351 = vmatpush1.msra.mxu0 0.0
      %352 = vmatprep.subr.mxu0 0.0
      %353 = vmatpush1.msra.mxu0 0.0
      %354 = vmatprep.subr.mxu0 0.0
      %355 = vmatpush1.msra.mxu0 0.0
      %356 = vmatprep.subr.mxu0 0.0
      %357 = vmatpush1.msra.mxu0 0.0
      %358 = vmatprep.subr.mxu0 0.0
      %359 = vmatpush1.msra.mxu0 0.0
      %360 = vmatprep.subr.mxu0 0.0
      %361 = vmatpush1.msra.mxu0 0.0
      %362 = vmatprep.subr.mxu0 0.0
      %363 = vmatpush1.msra.mxu0 0.0
      %364 = vmatprep.subr.mxu0 0.0
      %365 = vmatpush1.msra.mxu0 0.0
      %366 = vmatprep.subr.mxu0 0.0
      %367 = vmatpush1.msra.mxu0 0.0
      %368 = vmatprep.subr.mxu0 0.0
      %369 = vmatpush1.msra.mxu0 0.0
      %370 = vmatprep.subr.mxu0 0.0
      %371 = vmatpush1.msra.mxu0 0.0
      %372 = vmatprep.subr.mxu0 0.0
      %373 = vmatpush1.msra.mxu0 0.0
      %374 = vmatprep.subr.mxu0 0.0
      %375 = vmatpush1.msra.mxu0 0.0
      %376 = vmatprep.subr.mxu0 0.0
      %377 = vmatpush1.msra.mxu0 0.0
      %378 = vmatprep.subr.mxu0 0.0
      %379 = vmatpush1.msra.mxu0 0.0
      %380 = vmatprep.subr.mxu0 0.0
      %381 = vmatpush1.msra.mxu0 0.0
      %382 = vmatprep.subr.mxu0 0.0
      %383 = vmatpush1.msra.mxu0 0.0
      %384 = vmatprep.subr.mxu0 0.0
      %385 = vmatpush1.msra.mxu0 0.0
      %386 = vmatprep.subr.mxu0 0.0
      %387 = vmatpush1.msra.mxu0 0.0
      %388 = vmatprep.subr.mxu0 0.0
      %389 = vmatpush1.msra.mxu0 0.0
      %390 = vmatprep.subr.mxu0 0.0
      %391 = vmatpush1.msra.mxu0 0.0
      %392 = vmatprep.subr.mxu0 0.0
      %393 = vmatpush1.msra.mxu0 0.0
      %394 = vmatprep.subr.mxu0 0.0
      %395 = vmatpush1.msra.mxu0 0.0
      %396 = vmatprep.subr.mxu0 0.0
      %397 = vmatpush1.msra.mxu0 0.0
      %398 = vmatprep.subr.mxu0 0.0
      %399 = vmatpush1.msra.mxu0 0.0
      %400 = vmatprep.subr.mxu0 0.0
      %401 = vmatpush1.msra.mxu0 0.0
      %402 = vmatprep.subr.mxu0 0.0
      %403 = vmatpush1.msra.mxu0 0.0
      %404 = vmatprep.subr.mxu0 0.0
      %405 = vmatpush1.msra.mxu0 0.0
      %406 = vmatprep.subr.mxu0 0.0
      %407 = vmatpush1.msra.mxu0 0.0
      %408 = vmatprep.subr.mxu0 0.0
      %409 = vmatpush1.msra.mxu0 0.0
      %410 = vmatprep.subr.mxu0 0.0
      %411 = vmatpush1.msra.mxu0 0.0
      %412 = vmatprep.mubr.f32.mxu0 0.0
      %413 = vmatmul.mubr.f32.gmra.mrb[0].mxu0 %v342
      %v414 = vpop.f32.mrb[0].mxu0
      %v415 = vadd.f32 0.0, %v414
      %v416 = vpop.f32.mrb[0].mxu0
      %417 = vdwg.mxu0
      %v419 = vsel %vm340, %v337, 0
      %v422 = vsel %vm344, %v325, 0
      %424 = vmatprep.subr.mxu0 0.0
      %425 = vmatpush1.msra.mxu0 %v422
      %426 = vmatprep.subr.mxu0 0.0
      %427 = vmatpush1.msra.mxu0 0.0
      %428 = vmatprep.subr.mxu0 0.0
      %429 = vmatpush1.msra.mxu0 0.0
      %430 = vmatprep.subr.mxu0 0.0
      %431 = vmatpush1.msra.mxu0 0.0
      %432 = vmatprep.subr.mxu0 0.0
      %433 = vmatpush1.msra.mxu0 0.0
      %434 = vmatprep.subr.mxu0 0.0
      %435 = vmatpush1.msra.mxu0 0.0
      %436 = vmatprep.subr.mxu0 0.0
      %437 = vmatpush1.msra.mxu0 0.0
      %438 = vmatprep.subr.mxu0 0.0
      %439 = vmatpush1.msra.mxu0 0.0
      %440 = vmatprep.subr.mxu0 0.0
      %441 = vmatpush1.msra.mxu0 0.0
      %442 = vmatprep.subr.mxu0 0.0
      %443 = vmatpush1.msra.mxu0 0.0
      %444 = vmatprep.subr.mxu0 0.0
      %445 = vmatpush1.msra.mxu0 0.0
      %446 = vmatprep.subr.mxu0 0.0
      %447 = vmatpush1.msra.mxu0 0.0
      %448 = vmatprep.subr.mxu0 0.0
      %449 = vmatpush1.msra.mxu0 0.0
      %450 = vmatprep.subr.mxu0 0.0
      %451 = vmatpush1.msra.mxu0 0.0
      %452 = vmatprep.subr.mxu0 0.0
      %453 = vmatpush1.msra.mxu0 0.0
      %454 = vmatprep.subr.mxu0 0.0
      %455 = vmatpush1.msra.mxu0 0.0
      %456 = vmatprep.subr.mxu0 0.0
      %457 = vmatpush1.msra.mxu0 0.0
      %458 = vmatprep.subr.mxu0 0.0
      %459 = vmatpush1.msra.mxu0 0.0
      %460 = vmatprep.subr.mxu0 0.0
      %461 = vmatpush1.msra.mxu0 0.0
      %462 = vmatprep.subr.mxu0 0.0
      %463 = vmatpush1.msra.mxu0 0.0
      %464 = vmatprep.subr.mxu0 0.0
      %465 = vmatpush1.msra.mxu0 0.0
      %466 = vmatprep.subr.mxu0 0.0
      %467 = vmatpush1.msra.mxu0 0.0
      %468 = vmatprep.subr.mxu0 0.0
      %469 = vmatpush1.msra.mxu0 0.0
      %470 = vmatprep.subr.mxu0 0.0
      %471 = vmatpush1.msra.mxu0 0.0
      %472 = vmatprep.subr.mxu0 0.0
      %473 = vmatpush1.msra.mxu0 0.0
      %474 = vmatprep.subr.mxu0 0.0
      %475 = vmatpush1.msra.mxu0 0.0
      %476 = vmatprep.subr.mxu0 0.0
      %477 = vmatpush1.msra.mxu0 0.0
      %478 = vmatprep.subr.mxu0 0.0
      %479 = vmatpush1.msra.mxu0 0.0
      %480 = vmatprep.subr.mxu0 0.0
      %481 = vmatpush1.msra.mxu0 0.0
      %482 = vmatprep.subr.mxu0 0.0
      %483 = vmatpush1.msra.mxu0 0.0
      %484 = vmatprep.subr.mxu0 0.0
      %485 = vmatpush1.msra.mxu0 0.0
      %486 = vmatprep.subr.mxu0 0.0
      %487 = vmatpush1.msra.mxu0 0.0
      %488 = vmatprep.mubr.f32.mxu0 0.0
      %489 = vmatmul.mubr.f32.gmra.mrb[0].mxu0 %v419
      %v490 = vpop.f32.mrb[0].mxu0
      %v491 = vadd.f32 0.0, %v490
      %v492 = vpop.f32.mrb[0].mxu0
      %493 = vdwg.mxu0
      %v495 = vsel %vm340, %v338, 0
      %v498 = vsel %vm344, %v326, 0
      %500 = vmatprep.subr.mxu0 0.0
      %501 = vmatpush1.msra.mxu0 %v498
      %502 = vmatprep.subr.mxu0 0.0
      %503 = vmatpush1.msra.mxu0 0.0
      %504 = vmatprep.subr.mxu0 0.0
      %505 = vmatpush1.msra.mxu0 0.0
      %506 = vmatprep.subr.mxu0 0.0
      %507 = vmatpush1.msra.mxu0 0.0
      %508 = vmatprep.subr.mxu0 0.0
      %509 = vmatpush1.msra.mxu0 0.0
      %510 = vmatprep.subr.mxu0 0.0
      %511 = vmatpush1.msra.mxu0 0.0
      %512 = vmatprep.subr.mxu0 0.0
      %513 = vmatpush1.msra.mxu0 0.0
      %514 = vmatprep.subr.mxu0 0.0
      %515 = vmatpush1.msra.mxu0 0.0
      %516 = vmatprep.subr.mxu0 0.0
      %517 = vmatpush1.msra.mxu0 0.0
      %518 = vmatprep.subr.mxu0 0.0
      %519 = vmatpush1.msra.mxu0 0.0
      %520 = vmatprep.subr.mxu0 0.0
      %521 = vmatpush1.msra.mxu0 0.0
      %522 = vmatprep.subr.mxu0 0.0
      %523 = vmatpush1.msra.mxu0 0.0
      %524 = vmatprep.subr.mxu0 0.0
      %525 = vmatpush1.msra.mxu0 0.0
      %526 = vmatprep.subr.mxu0 0.0
      %527 = vmatpush1.msra.mxu0 0.0
      %528 = vmatprep.subr.mxu0 0.0
      %529 = vmatpush1.msra.mxu0 0.0
      %530 = vmatprep.subr.mxu0 0.0
      %531 = vmatpush1.msra.mxu0 0.0
      %532 = vmatprep.subr.mxu0 0.0
      %533 = vmatpush1.msra.mxu0 0.0
      %534 = vmatprep.subr.mxu0 0.0
      %535 = vmatpush1.msra.mxu0 0.0
      %536 = vmatprep.subr.mxu0 0.0
      %537 = vmatpush1.msra.mxu0 0.0
      %538 = vmatprep.subr.mxu0 0.0
      %539 = vmatpush1.msra.mxu0 0.0
      %540 = vmatprep.subr.mxu0 0.0
      %541 = vmatpush1.msra.mxu0 0.0
      %542 = vmatprep.subr.mxu0 0.0
      %543 = vmatpush1.msra.mxu0 0.0
      %544 = vmatprep.subr.mxu0 0.0
      %545 = vmatpush1.msra.mxu0 0.0
      %546 = vmatprep.subr.mxu0 0.0
      %547 = vmatpush1.msra.mxu0 0.0
      %548 = vmatprep.subr.mxu0 0.0
      %549 = vmatpush1.msra.mxu0 0.0
      %550 = vmatprep.subr.mxu0 0.0
      %551 = vmatpush1.msra.mxu0 0.0
      %552 = vmatprep.subr.mxu0 0.0
      %553 = vmatpush1.msra.mxu0 0.0
      %554 = vmatprep.subr.mxu0 0.0
      %555 = vmatpush1.msra.mxu0 0.0
      %556 = vmatprep.subr.mxu0 0.0
      %557 = vmatpush1.msra.mxu0 0.0
      %558 = vmatprep.subr.mxu0 0.0
      %559 = vmatpush1.msra.mxu0 0.0
      %560 = vmatprep.subr.mxu0 0.0
      %561 = vmatpush1.msra.mxu0 0.0
      %562 = vmatprep.subr.mxu0 0.0
      %563 = vmatpush1.msra.mxu0 0.0
      %564 = vmatprep.mubr.f32.mxu0 0.0
      %565 = vmatmul.mubr.f32.gmra.mrb[0].mxu0 %v495
      %v566 = vpop.f32.mrb[0].mxu0
      %v567 = vadd.f32 0.0, %v566
      %v568 = vpop.f32.mrb[0].mxu0
      %569 = vdwg.mxu0
      %v571 = vsel %vm340, %v339, 0
      %v574 = vsel %vm344, %v327, 0
      %576 = vmatprep.subr.mxu0 0.0
      %577 = vmatpush1.msra.mxu0 %v574
      %578 = vmatprep.subr.mxu0 0.0
      %579 = vmatpush1.msra.mxu0 0.0
      %580 = vmatprep.subr.mxu0 0.0
      %581 = vmatpush1.msra.mxu0 0.0
      %582 = vmatprep.subr.mxu0 0.0
      %583 = vmatpush1.msra.mxu0 0.0
      %584 = vmatprep.subr.mxu0 0.0
      %585 = vmatpush1.msra.mxu0 0.0
      %586 = vmatprep.subr.mxu0 0.0
      %587 = vmatpush1.msra.mxu0 0.0
      %588 = vmatprep.subr.mxu0 0.0
      %589 = vmatpush1.msra.mxu0 0.0
      %590 = vmatprep.subr.mxu0 0.0
      %591 = vmatpush1.msra.mxu0 0.0
      %592 = vmatprep.subr.mxu0 0.0
      %593 = vmatpush1.msra.mxu0 0.0
      %594 = vmatprep.subr.mxu0 0.0
      %595 = vmatpush1.msra.mxu0 0.0
      %596 = vmatprep.subr.mxu0 0.0
      %597 = vmatpush1.msra.mxu0 0.0
      %598 = vmatprep.subr.mxu0 0.0
      %599 = vmatpush1.msra.mxu0 0.0
      %600 = vmatprep.subr.mxu0 0.0
      %601 = vmatpush1.msra.mxu0 0.0
      %602 = vmatprep.subr.mxu0 0.0
      %603 = vmatpush1.msra.mxu0 0.0
      %604 = vmatprep.subr.mxu0 0.0
      %605 = vmatpush1.msra.mxu0 0.0
      %606 = vmatprep.subr.mxu0 0.0
      %607 = vmatpush1.msra.mxu0 0.0
      %608 = vmatprep.subr.mxu0 0.0
      %609 = vmatpush1.msra.mxu0 0.0
      %610 = vmatprep.subr.mxu0 0.0
      %611 = vmatpush1.msra.mxu0 0.0
      %612 = vmatprep.subr.mxu0 0.0
      %613 = vmatpush1.msra.mxu0 0.0
      %614 = vmatprep.subr.mxu0 0.0
      %615 = vmatpush1.msra.mxu0 0.0
      %616 = vmatprep.subr.mxu0 0.0
      %617 = vmatpush1.msra.mxu0 0.0
      %618 = vmatprep.subr.mxu0 0.0
      %619 = vmatpush1.msra.mxu0 0.0
      %620 = vmatprep.subr.mxu0 0.0
      %621 = vmatpush1.msra.mxu0 0.0
      %622 = vmatprep.subr.mxu0 0.0
      %623 = vmatpush1.msra.mxu0 0.0
      %624 = vmatprep.subr.mxu0 0.0
      %625 = vmatpush1.msra.mxu0 0.0
      %626 = vmatprep.subr.mxu0 0.0
      %627 = vmatpush1.msra.mxu0 0.0
      %628 = vmatprep.subr.mxu0 0.0
      %629 = vmatpush1.msra.mxu0 0.0
      %630 = vmatprep.subr.mxu0 0.0
      %631 = vmatpush1.msra.mxu0 0.0
      %632 = vmatprep.subr.mxu0 0.0
      %633 = vmatpush1.msra.mxu0 0.0
      %634 = vmatprep.subr.mxu0 0.0
      %635 = vmatpush1.msra.mxu0 0.0
      %636 = vmatprep.subr.mxu0 0.0
      %637 = vmatpush1.msra.mxu0 0.0
      %638 = vmatprep.subr.mxu0 0.0
      %639 = vmatpush1.msra.mxu0 0.0
      %640 = vmatprep.mubr.f32.mxu0 0.0
      %641 = vmatmul.mubr.f32.gmra.mrb[0].mxu0 %v571
      %v642 = vpop.f32.mrb[0].mxu0
      %v643 = vadd.f32 0.0, %v642
      %v644 = vpop.f32.mrb[0].mxu0
      %645 = vdwg.mxu0
      %v647 = vsel %vm340, %v316, 0
      %v650 = vsel %vm344, %v328, 0
      %652 = vmatprep.subr.mxu0 0.0
      %653 = vmatpush1.msra.mxu0 %v650
      %654 = vmatprep.subr.mxu0 0.0
      %655 = vmatpush1.msra.mxu0 0.0
      %656 = vmatprep.subr.mxu0 0.0
      %657 = vmatpush1.msra.mxu0 0.0
      %658 = vmatprep.subr.mxu0 0.0
      %659 = vmatpush1.msra.mxu0 0.0
      %660 = vmatprep.subr.mxu0 0.0
      %661 = vmatpush1.msra.mxu0 0.0
      %662 = vmatprep.subr.mxu0 0.0
      %663 = vmatpush1.msra.mxu0 0.0
      %664 = vmatprep.subr.mxu0 0.0
      %665 = vmatpush1.msra.mxu0 0.0
      %666 = vmatprep.subr.mxu0 0.0
      %667 = vmatpush1.msra.mxu0 0.0
      %668 = vmatprep.subr.mxu0 0.0
      %669 = vmatpush1.msra.mxu0 0.0
      %670 = vmatprep.subr.mxu0 0.0
      %671 = vmatpush1.msra.mxu0 0.0
      %672 = vmatprep.subr.mxu0 0.0
      %673 = vmatpush1.msra.mxu0 0.0
      %674 = vmatprep.subr.mxu0 0.0
      %675 = vmatpush1.msra.mxu0 0.0
      %676 = vmatprep.subr.mxu0 0.0
      %677 = vmatpush1.msra.mxu0 0.0
      %678 = vmatprep.subr.mxu0 0.0
      %679 = vmatpush1.msra.mxu0 0.0
      %680 = vmatprep.subr.mxu0 0.0
      %681 = vmatpush1.msra.mxu0 0.0
      %682 = vmatprep.subr.mxu0 0.0
      %683 = vmatpush1.msra.mxu0 0.0
      %684 = vmatprep.subr.mxu0 0.0
      %685 = vmatpush1.msra.mxu0 0.0
      %686 = vmatprep.subr.mxu0 0.0
      %687 = vmatpush1.msra.mxu0 0.0
      %688 = vmatprep.subr.mxu0 0.0
      %689 = vmatpush1.msra.mxu0 0.0
      %690 = vmatprep.subr.mxu0 0.0
      %691 = vmatpush1.msra.mxu0 0.0
      %692 = vmatprep.subr.mxu0 0.0
      %693 = vmatpush1.msra.mxu0 0.0
      %694 = vmatprep.subr.mxu0 0.0
      %695 = vmatpush1.msra.mxu0 0.0
      %696 = vmatprep.subr.mxu0 0.0
      %697 = vmatpush1.msra.mxu0 0.0
      %698 = vmatprep.subr.mxu0 0.0
      %699 = vmatpush1.msra.mxu0 0.0
      %700 = vmatprep.subr.mxu0 0.0
      %701 = vmatpush1.msra.mxu0 0.0
      %702 = vmatprep.subr.mxu0 0.0
      %703 = vmatpush1.msra.mxu0 0.0
      %704 = vmatprep.subr.mxu0 0.0
      %705 = vmatpush1.msra.mxu0 0.0
      %706 = vmatprep.subr.mxu0 0.0
      %707 = vmatpush1.msra.mxu0 0.0
      %708 = vmatprep.subr.mxu0 0.0
      %709 = vmatpush1.msra.mxu0 0.0
      %710 = vmatprep.subr.mxu0 0.0
      %711 = vmatpush1.msra.mxu0 0.0
      %712 = vmatprep.subr.mxu0 0.0
      %713 = vmatpush1.msra.mxu0 0.0
      %714 = vmatprep.subr.mxu0 0.0
      %715 = vmatpush1.msra.mxu0 0.0
      %716 = vmatprep.mubr.f32.mxu0 0.0
      %717 = vmatmul.mubr.f32.gmra.mrb[0].mxu0 %v647
      %v718 = vpop.f32.mrb[0].mxu0
      %v719 = vadd.f32 0.0, %v718
      %v720 = vpop.f32.mrb[0].mxu0
      %721 = vdwg.mxu0
      %v723 = vsel %vm340, %v317, 0
      %v726 = vsel %vm344, %v329, 0
      %728 = vmatprep.subr.mxu0 0.0
      %729 = vmatpush1.msra.mxu0 %v726
      %730 = vmatprep.subr.mxu0 0.0
      %731 = vmatpush1.msra.mxu0 0.0
      %732 = vmatprep.subr.mxu0 0.0
      %733 = vmatpush1.msra.mxu0 0.0
      %734 = vmatprep.subr.mxu0 0.0
      %735 = vmatpush1.msra.mxu0 0.0
      %736 = vmatprep.subr.mxu0 0.0
      %737 = vmatpush1.msra.mxu0 0.0
      %738 = vmatprep.subr.mxu0 0.0
      %739 = vmatpush1.msra.mxu0 0.0
      %740 = vmatprep.subr.mxu0 0.0
      %741 = vmatpush1.msra.mxu0 0.0
      %742 = vmatprep.subr.mxu0 0.0
      %743 = vmatpush1.msra.mxu0 0.0
      %744 = vmatprep.subr.mxu0 0.0
      %745 = vmatpush1.msra.mxu0 0.0
      %746 = vmatprep.subr.mxu0 0.0
      %747 = vmatpush1.msra.mxu0 0.0
      %748 = vmatprep.subr.mxu0 0.0
      %749 = vmatpush1.msra.mxu0 0.0
      %750 = vmatprep.subr.mxu0 0.0
      %751 = vmatpush1.msra.mxu0 0.0
      %752 = vmatprep.subr.mxu0 0.0
      %753 = vmatpush1.msra.mxu0 0.0
      %754 = vmatprep.subr.mxu0 0.0
      %755 = vmatpush1.msra.mxu0 0.0
      %756 = vmatprep.subr.mxu0 0.0
      %757 = vmatpush1.msra.mxu0 0.0
      %758 = vmatprep.subr.mxu0 0.0
      %759 = vmatpush1.msra.mxu0 0.0
      %760 = vmatprep.subr.mxu0 0.0
      %761 = vmatpush1.msra.mxu0 0.0
      %762 = vmatprep.subr.mxu0 0.0
      %763 = vmatpush1.msra.mxu0 0.0
      %764 = vmatprep.subr.mxu0 0.0
      %765 = vmatpush1.msra.mxu0 0.0
      %766 = vmatprep.subr.mxu0 0.0
      %767 = vmatpush1.msra.mxu0 0.0
      %768 = vmatprep.subr.mxu0 0.0
      %769 = vmatpush1.msra.mxu0 0.0
      %770 = vmatprep.subr.mxu0 0.0
      %771 = vmatpush1.msra.mxu0 0.0
      %772 = vmatprep.subr.mxu0 0.0
      %773 = vmatpush1.msra.mxu0 0.0
      %774 = vmatprep.subr.mxu0 0.0
      %775 = vmatpush1.msra.mxu0 0.0
      %776 = vmatprep.subr.mxu0 0.0
      %777 = vmatpush1.msra.mxu0 0.0
      %778 = vmatprep.subr.mxu0 0.0
      %779 = vmatpush1.msra.mxu0 0.0
      %780 = vmatprep.subr.mxu0 0.0
      %781 = vmatpush1.msra.mxu0 0.0
      %782 = vmatprep.subr.mxu0 0.0
      %783 = vmatpush1.msra.mxu0 0.0
      %784 = vmatprep.subr.mxu0 0.0
      %785 = vmatpush1.msra.mxu0 0.0
      %786 = vmatprep.subr.mxu0 0.0
      %787 = vmatpush1.msra.mxu0 0.0
      %788 = vmatprep.subr.mxu0 0.0
      %789 = vmatpush1.msra.mxu0 0.0
      %790 = vmatprep.subr.mxu0 0.0
      %791 = vmatpush1.msra.mxu0 0.0
      %792 = vmatprep.mubr.f32.mxu0 0.0
      %793 = vmatmul.mubr.f32.gmra.mrb[0].mxu0 %v723
      %v794 = vpop.f32.mrb[0].mxu0
      %v795 = vadd.f32 0.0, %v794
      %v796 = vpop.f32.mrb[0].mxu0
      %797 = vdwg.mxu0
      %v799 = vsel %vm340, %v318, 0
      %v802 = vsel %vm344, %v330, 0
      %804 = vmatprep.subr.mxu0 0.0
      %805 = vmatpush1.msra.mxu0 %v802
      %806 = vmatprep.subr.mxu0 0.0
      %807 = vmatpush1.msra.mxu0 0.0
      %808 = vmatprep.subr.mxu0 0.0
      %809 = vmatpush1.msra.mxu0 0.0
      %810 = vmatprep.subr.mxu0 0.0
      %811 = vmatpush1.msra.mxu0 0.0
      %812 = vmatprep.subr.mxu0 0.0
      %813 = vmatpush1.msra.mxu0 0.0
      %814 = vmatprep.subr.mxu0 0.0
      %815 = vmatpush1.msra.mxu0 0.0
      %816 = vmatprep.subr.mxu0 0.0
      %817 = vmatpush1.msra.mxu0 0.0
      %818 = vmatprep.subr.mxu0 0.0
      %819 = vmatpush1.msra.mxu0 0.0
      %820 = vmatprep.subr.mxu0 0.0
      %821 = vmatpush1.msra.mxu0 0.0
      %822 = vmatprep.subr.mxu0 0.0
      %823 = vmatpush1.msra.mxu0 0.0
      %824 = vmatprep.subr.mxu0 0.0
      %825 = vmatpush1.msra.mxu0 0.0
      %826 = vmatprep.subr.mxu0 0.0
      %827 = vmatpush1.msra.mxu0 0.0
      %828 = vmatprep.subr.mxu0 0.0
      %829 = vmatpush1.msra.mxu0 0.0
      %830 = vmatprep.subr.mxu0 0.0
      %831 = vmatpush1.msra.mxu0 0.0
      %832 = vmatprep.subr.mxu0 0.0
      %833 = vmatpush1.msra.mxu0 0.0
      %834 = vmatprep.subr.mxu0 0.0
      %835 = vmatpush1.msra.mxu0 0.0
      %836 = vmatprep.subr.mxu0 0.0
      %837 = vmatpush1.msra.mxu0 0.0
      %838 = vmatprep.subr.mxu0 0.0
      %839 = vmatpush1.msra.mxu0 0.0
      %840 = vmatprep.subr.mxu0 0.0
      %841 = vmatpush1.msra.mxu0 0.0
      %842 = vmatprep.subr.mxu0 0.0
      %843 = vmatpush1.msra.mxu0 0.0
      %844 = vmatprep.subr.mxu0 0.0
      %845 = vmatpush1.msra.mxu0 0.0
      %846 = vmatprep.subr.mxu0 0.0
      %847 = vmatpush1.msra.mxu0 0.0
      %848 = vmatprep.subr.mxu0 0.0
      %849 = vmatpush1.msra.mxu0 0.0
      %850 = vmatprep.subr.mxu0 0.0
      %851 = vmatpush1.msra.mxu0 0.0
      %852 = vmatprep.subr.mxu0 0.0
      %853 = vmatpush1.msra.mxu0 0.0
      %854 = vmatprep.subr.mxu0 0.0
      %855 = vmatpush1.msra.mxu0 0.0
      %856 = vmatprep.subr.mxu0 0.0
      %857 = vmatpush1.msra.mxu0 0.0
      %858 = vmatprep.subr.mxu0 0.0
      %859 = vmatpush1.msra.mxu0 0.0
      %860 = vmatprep.subr.mxu0 0.0
      %861 = vmatpush1.msra.mxu0 0.0
      %862 = vmatprep.subr.mxu0 0.0
      %863 = vmatpush1.msra.mxu0 0.0
      %864 = vmatprep.subr.mxu0 0.0
      %865 = vmatpush1.msra.mxu0 0.0
      %866 = vmatprep.subr.mxu0 0.0
      %867 = vmatpush1.msra.mxu0 0.0
      %868 = vmatprep.mubr.f32.mxu0 0.0
      %869 = vmatmul.mubr.f32.gmra.mrb[0].mxu0 %v799
      %v870 = vpop.f32.mrb[0].mxu0
      %v871 = vadd.f32 0.0, %v870
      %v872 = vpop.f32.mrb[0].mxu0
      %873 = vdwg.mxu0
      %v875 = vsel %vm340, %v319, 0
      %v878 = vsel %vm344, %v331, 0
      %880 = vmatprep.subr.mxu0 0.0
      %881 = vmatpush1.msra.mxu0 %v878
      %882 = vmatprep.subr.mxu0 0.0
      %883 = vmatpush1.msra.mxu0 0.0
      %884 = vmatprep.subr.mxu0 0.0
      %885 = vmatpush1.msra.mxu0 0.0
      %886 = vmatprep.subr.mxu0 0.0
      %887 = vmatpush1.msra.mxu0 0.0
      %888 = vmatprep.subr.mxu0 0.0
      %889 = vmatpush1.msra.mxu0 0.0
      %890 = vmatprep.subr.mxu0 0.0
      %891 = vmatpush1.msra.mxu0 0.0
      %892 = vmatprep.subr.mxu0 0.0
      %893 = vmatpush1.msra.mxu0 0.0
      %894 = vmatprep.subr.mxu0 0.0
      %895 = vmatpush1.msra.mxu0 0.0
      %896 = vmatprep.subr.mxu0 0.0
      %897 = vmatpush1.msra.mxu0 0.0
      %898 = vmatprep.subr.mxu0 0.0
      %899 = vmatpush1.msra.mxu0 0.0
      %900 = vmatprep.subr.mxu0 0.0
      %901 = vmatpush1.msra.mxu0 0.0
      %902 = vmatprep.subr.mxu0 0.0
      %903 = vmatpush1.msra.mxu0 0.0
      %904 = vmatprep.subr.mxu0 0.0
      %905 = vmatpush1.msra.mxu0 0.0
      %906 = vmatprep.subr.mxu0 0.0
      %907 = vmatpush1.msra.mxu0 0.0
      %908 = vmatprep.subr.mxu0 0.0
      %909 = vmatpush1.msra.mxu0 0.0
      %910 = vmatprep.subr.mxu0 0.0
      %911 = vmatpush1.msra.mxu0 0.0
      %912 = vmatprep.subr.mxu0 0.0
      %913 = vmatpush1.msra.mxu0 0.0
      %914 = vmatprep.subr.mxu0 0.0
      %915 = vmatpush1.msra.mxu0 0.0
      %916 = vmatprep.subr.mxu0 0.0
      %917 = vmatpush1.msra.mxu0 0.0
      %918 = vmatprep.subr.mxu0 0.0
      %919 = vmatpush1.msra.mxu0 0.0
      %920 = vmatprep.subr.mxu0 0.0
      %921 = vmatpush1.msra.mxu0 0.0
      %922 = vmatprep.subr.mxu0 0.0
      %923 = vmatpush1.msra.mxu0 0.0
      %924 = vmatprep.subr.mxu0 0.0
      %925 = vmatpush1.msra.mxu0 0.0
      %926 = vmatprep.subr.mxu0 0.0
      %927 = vmatpush1.msra.mxu0 0.0
      %928 = vmatprep.subr.mxu0 0.0
      %929 = vmatpush1.msra.mxu0 0.0
      %930 = vmatprep.subr.mxu0 0.0
      %931 = vmatpush1.msra.mxu0 0.0
      %932 = vmatprep.subr.mxu0 0.0
      %933 = vmatpush1.msra.mxu0 0.0
      %934 = vmatprep.subr.mxu0 0.0
      %935 = vmatpush1.msra.mxu0 0.0
      %936 = vmatprep.subr.mxu0 0.0
      %937 = vmatpush1.msra.mxu0 0.0
      %938 = vmatprep.subr.mxu0 0.0
      %939 = vmatpush1.msra.mxu0 0.0
      %940 = vmatprep.subr.mxu0 0.0
      %941 = vmatpush1.msra.mxu0 0.0
      %942 = vmatprep.subr.mxu0 0.0
      %943 = vmatpush1.msra.mxu0 0.0
      %944 = vmatprep.mubr.f32.mxu0 0.0
      %945 = vmatmul.mubr.f32.gmra.mrb[0].mxu0 %v875
      %v946 = vpop.f32.mrb[0].mxu0
      %v947 = vadd.f32 0.0, %v946
      %v948 = vpop.f32.mrb[0].mxu0
      %949 = vdwg.mxu0
      %v951 = vsel %vm340, %v320, 0
      %v954 = vsel %vm344, %v332, 0
      %956 = vmatprep.subr.mxu0 0.0
      %957 = vmatpush1.msra.mxu0 %v954
      %958 = vmatprep.subr.mxu0 0.0
      %959 = vmatpush1.msra.mxu0 0.0
      %960 = vmatprep.subr.mxu0 0.0
      %961 = vmatpush1.msra.mxu0 0.0
      %962 = vmatprep.subr.mxu0 0.0
      %963 = vmatpush1.msra.mxu0 0.0
      %964 = vmatprep.subr.mxu0 0.0
      %965 = vmatpush1.msra.mxu0 0.0
      %966 = vmatprep.subr.mxu0 0.0
      %967 = vmatpush1.msra.mxu0 0.0
      %968 = vmatprep.subr.mxu0 0.0
      %969 = vmatpush1.msra.mxu0 0.0
      %970 = vmatprep.subr.mxu0 0.0
      %971 = vmatpush1.msra.mxu0 0.0
      %972 = vmatprep.subr.mxu0 0.0
      %973 = vmatpush1.msra.mxu0 0.0
      %974 = vmatprep.subr.mxu0 0.0
      %975 = vmatpush1.msra.mxu0 0.0
      %976 = vmatprep.subr.mxu0 0.0
      %977 = vmatpush1.msra.mxu0 0.0
      %978 = vmatprep.subr.mxu0 0.0
      %979 = vmatpush1.msra.mxu0 0.0
      %980 = vmatprep.subr.mxu0 0.0
      %981 = vmatpush1.msra.mxu0 0.0
      %982 = vmatprep.subr.mxu0 0.0
      %983 = vmatpush1.msra.mxu0 0.0
      %984 = vmatprep.subr.mxu0 0.0
      %985 = vmatpush1.msra.mxu0 0.0
      %986 = vmatprep.subr.mxu0 0.0
      %987 = vmatpush1.msra.mxu0 0.0
      %988 = vmatprep.subr.mxu0 0.0
      %989 = vmatpush1.msra.mxu0 0.0
      %990 = vmatprep.subr.mxu0 0.0
      %991 = vmatpush1.msra.mxu0 0.0
      %992 = vmatprep.subr.mxu0 0.0
      %993 = vmatpush1.msra.mxu0 0.0
      %994 = vmatprep.subr.mxu0 0.0
      %995 = vmatpush1.msra.mxu0 0.0
      %996 = vmatprep.subr.mxu0 0.0
      %997 = vmatpush1.msra.mxu0 0.0
      %998 = vmatprep.subr.mxu0 0.0
      %999 = vmatpush1.msra.mxu0 0.0
      %1000 = vmatprep.subr.mxu0 0.0
      %1001 = vmatpush1.msra.mxu0 0.0
      %1002 = vmatprep.subr.mxu0 0.0
      %1003 = vmatpush1.msra.mxu0 0.0
      %1004 = vmatprep.subr.mxu0 0.0
      %1005 = vmatpush1.msra.mxu0 0.0
      %1006 = vmatprep.subr.mxu0 0.0
      %1007 = vmatpush1.msra.mxu0 0.0
      %1008 = vmatprep.subr.mxu0 0.0
      %1009 = vmatpush1.msra.mxu0 0.0
      %1010 = vmatprep.subr.mxu0 0.0
      %1011 = vmatpush1.msra.mxu0 0.0
      %1012 = vmatprep.subr.mxu0 0.0
      %1013 = vmatpush1.msra.mxu0 0.0
      %1014 = vmatprep.subr.mxu0 0.0
      %1015 = vmatpush1.msra.mxu0 0.0
      %1016 = vmatprep.subr.mxu0 0.0
      %1017 = vmatpush1.msra.mxu0 0.0
      %1018 = vmatprep.subr.mxu0 0.0
      %1019 = vmatpush1.msra.mxu0 0.0
      %1020 = vmatprep.mubr.f32.mxu0 0.0
      %1021 = vmatmul.mubr.f32.gmra.mrb[0].mxu0 %v951
      %v1022 = vpop.f32.mrb[0].mxu0
      %v1023 = vadd.f32 0.0, %v1022
      %v1024 = vpop.f32.mrb[0].mxu0
      %1025 = vdwg.mxu0
      %v1027 = vsel %vm340, %v321, 0
      %v1030 = vsel %vm344, %v333, 0
      %1032 = vmatprep.subr.mxu0 0.0
      %1033 = vmatpush1.msra.mxu0 %v1030
      %1034 = vmatprep.subr.mxu0 0.0
      %1035 = vmatpush1.msra.mxu0 0.0
      %1036 = vmatprep.subr.mxu0 0.0
      %1037 = vmatpush1.msra.mxu0 0.0
      %1038 = vmatprep.subr.mxu0 0.0
      %1039 = vmatpush1.msra.mxu0 0.0
      %1040 = vmatprep.subr.mxu0 0.0
      %1041 = vmatpush1.msra.mxu0 0.0
      %1042 = vmatprep.subr.mxu0 0.0
      %1043 = vmatpush1.msra.mxu0 0.0
      %1044 = vmatprep.subr.mxu0 0.0
      %1045 = vmatpush1.msra.mxu0 0.0
      %1046 = vmatprep.subr.mxu0 0.0
      %1047 = vmatpush1.msra.mxu0 0.0
      %1048 = vmatprep.subr.mxu0 0.0
      %1049 = vmatpush1.msra.mxu0 0.0
      %1050 = vmatprep.subr.mxu0 0.0
      %1051 = vmatpush1.msra.mxu0 0.0
      %1052 = vmatprep.subr.mxu0 0.0
      %1053 = vmatpush1.msra.mxu0 0.0
      %1054 = vmatprep.subr.mxu0 0.0
      %1055 = vmatpush1.msra.mxu0 0.0
      %1056 = vmatprep.subr.mxu0 0.0
      %1057 = vmatpush1.msra.mxu0 0.0
      %1058 = vmatprep.subr.mxu0 0.0
      %1059 = vmatpush1.msra.mxu0 0.0
      %1060 = vmatprep.subr.mxu0 0.0
      %1061 = vmatpush1.msra.mxu0 0.0
      %1062 = vmatprep.subr.mxu0 0.0
      %1063 = vmatpush1.msra.mxu0 0.0
      %1064 = vmatprep.subr.mxu0 0.0
      %1065 = vmatpush1.msra.mxu0 0.0
      %1066 = vmatprep.subr.mxu0 0.0
      %1067 = vmatpush1.msra.mxu0 0.0
      %1068 = vmatprep.subr.mxu0 0.0
      %1069 = vmatpush1.msra.mxu0 0.0
      %1070 = vmatprep.subr.mxu0 0.0
      %1071 = vmatpush1.msra.mxu0 0.0
      %1072 = vmatprep.subr.mxu0 0.0
      %1073 = vmatpush1.msra.mxu0 0.0
      %1074 = vmatprep.subr.mxu0 0.0
      %1075 = vmatpush1.msra.mxu0 0.0
      %1076 = vmatprep.subr.mxu0 0.0
      %1077 = vmatpush1.msra.mxu0 0.0
      %1078 = vmatprep.subr.mxu0 0.0
      %1079 = vmatpush1.msra.mxu0 0.0
      %1080 = vmatprep.subr.mxu0 0.0
      %1081 = vmatpush1.msra.mxu0 0.0
      %1082 = vmatprep.subr.mxu0 0.0
      %1083 = vmatpush1.msra.mxu0 0.0
      %1084 = vmatprep.subr.mxu0 0.0
      %1085 = vmatpush1.msra.mxu0 0.0
      %1086 = vmatprep.subr.mxu0 0.0
      %1087 = vmatpush1.msra.mxu0 0.0
      %1088 = vmatprep.subr.mxu0 0.0
      %1089 = vmatpush1.msra.mxu0 0.0
      %1090 = vmatprep.subr.mxu0 0.0
      %1091 = vmatpush1.msra.mxu0 0.0
      %1092 = vmatprep.subr.mxu0 0.0
      %1093 = vmatpush1.msra.mxu0 0.0
      %1094 = vmatprep.subr.mxu0 0.0
      %1095 = vmatpush1.msra.mxu0 0.0
      %1096 = vmatprep.mubr.f32.mxu0 0.0
      %1097 = vmatmul.mubr.f32.gmra.mrb[0].mxu0 %v1027
      %v1098 = vpop.f32.mrb[0].mxu0
      %v1099 = vadd.f32 0.0, %v1098
      %v1100 = vpop.f32.mrb[0].mxu0
      %1101 = vdwg.mxu0
      %v1103 = vsel %vm340, %v322, 0
      %v1106 = vsel %vm344, %v334, 0
      %1108 = vmatprep.subr.mxu0 0.0
      %1109 = vmatpush1.msra.mxu0 %v1106
      %1110 = vmatprep.subr.mxu0 0.0
      %1111 = vmatpush1.msra.mxu0 0.0
      %1112 = vmatprep.subr.mxu0 0.0
      %1113 = vmatpush1.msra.mxu0 0.0
      %1114 = vmatprep.subr.mxu0 0.0
      %1115 = vmatpush1.msra.mxu0 0.0
      %1116 = vmatprep.subr.mxu0 0.0
      %1117 = vmatpush1.msra.mxu0 0.0
      %1118 = vmatprep.subr.mxu0 0.0
      %1119 = vmatpush1.msra.mxu0 0.0
      %1120 = vmatprep.subr.mxu0 0.0
      %1121 = vmatpush1.msra.mxu0 0.0
      %1122 = vmatprep.subr.mxu0 0.0
      %1123 = vmatpush1.msra.mxu0 0.0
      %1124 = vmatprep.subr.mxu0 0.0
      %1125 = vmatpush1.msra.mxu0 0.0
      %1126 = vmatprep.subr.mxu0 0.0
      %1127 = vmatpush1.msra.mxu0 0.0
      %1128 = vmatprep.subr.mxu0 0.0
      %1129 = vmatpush1.msra.mxu0 0.0
      %1130 = vmatprep.subr.mxu0 0.0
      %1131 = vmatpush1.msra.mxu0 0.0
      %1132 = vmatprep.subr.mxu0 0.0
      %1133 = vmatpush1.msra.mxu0 0.0
      %1134 = vmatprep.subr.mxu0 0.0
      %1135 = vmatpush1.msra.mxu0 0.0
      %1136 = vmatprep.subr.mxu0 0.0
      %1137 = vmatpush1.msra.mxu0 0.0
      %1138 = vmatprep.subr.mxu0 0.0
      %1139 = vmatpush1.msra.mxu0 0.0
      %1140 = vmatprep.subr.mxu0 0.0
      %1141 = vmatpush1.msra.mxu0 0.0
      %1142 = vmatprep.subr.mxu0 0.0
      %1143 = vmatpush1.msra.mxu0 0.0
      %1144 = vmatprep.subr.mxu0 0.0
      %1145 = vmatpush1.msra.mxu0 0.0
      %1146 = vmatprep.subr.mxu0 0.0
      %1147 = vmatpush1.msra.mxu0 0.0
      %1148 = vmatprep.subr.mxu0 0.0
      %1149 = vmatpush1.msra.mxu0 0.0
      %1150 = vmatprep.subr.mxu0 0.0
      %1151 = vmatpush1.msra.mxu0 0.0
      %1152 = vmatprep.subr.mxu0 0.0
      %1153 = vmatpush1.msra.mxu0 0.0
      %1154 = vmatprep.subr.mxu0 0.0
      %1155 = vmatpush1.msra.mxu0 0.0
      %1156 = vmatprep.subr.mxu0 0.0
      %1157 = vmatpush1.msra.mxu0 0.0
      %1158 = vmatprep.subr.mxu0 0.0
      %1159 = vmatpush1.msra.mxu0 0.0
      %1160 = vmatprep.subr.mxu0 0.0
      %1161 = vmatpush1.msra.mxu0 0.0
      %1162 = vmatprep.subr.mxu0 0.0
      %1163 = vmatpush1.msra.mxu0 0.0
      %1164 = vmatprep.subr.mxu0 0.0
      %1165 = vmatpush1.msra.mxu0 0.0
      %1166 = vmatprep.subr.mxu0 0.0
      %1167 = vmatpush1.msra.mxu0 0.0
      %1168 = vmatprep.subr.mxu0 0.0
      %1169 = vmatpush1.msra.mxu0 0.0
      %1170 = vmatprep.subr.mxu0 0.0
      %1171 = vmatpush1.msra.mxu0 0.0
      %1172 = vmatprep.mubr.f32.mxu0 0.0
      %1173 = vmatmul.mubr.f32.gmra.mrb[0].mxu0 %v1103
      %v1174 = vpop.f32.mrb[0].mxu0
      %v1175 = vadd.f32 0.0, %v1174
      %v1176 = vpop.f32.mrb[0].mxu0
      %1177 = vdwg.mxu0
      %v1179 = vsel %vm340, %v323, 0
      %v1182 = vsel %vm344, %v335, 0
      %1184 = vmatprep.subr.mxu0 0.0
      %1185 = vmatpush1.msra.mxu0 %v1182
      %1186 = vmatprep.subr.mxu0 0.0
      %1187 = vmatpush1.msra.mxu0 0.0
      %1188 = vmatprep.subr.mxu0 0.0
      %1189 = vmatpush1.msra.mxu0 0.0
      %1190 = vmatprep.subr.mxu0 0.0
      %1191 = vmatpush1.msra.mxu0 0.0
      %1192 = vmatprep.subr.mxu0 0.0
      %1193 = vmatpush1.msra.mxu0 0.0
      %1194 = vmatprep.subr.mxu0 0.0
      %1195 = vmatpush1.msra.mxu0 0.0
      %1196 = vmatprep.subr.mxu0 0.0
      %1197 = vmatpush1.msra.mxu0 0.0
      %1198 = vmatprep.subr.mxu0 0.0
      %1199 = vmatpush1.msra.mxu0 0.0
      %1200 = vmatprep.subr.mxu0 0.0
      %1201 = vmatpush1.msra.mxu0 0.0
      %1202 = vmatprep.subr.mxu0 0.0
      %1203 = vmatpush1.msra.mxu0 0.0
      %1204 = vmatprep.subr.mxu0 0.0
      %1205 = vmatpush1.msra.mxu0 0.0
      %1206 = vmatprep.subr.mxu0 0.0
      %1207 = vmatpush1.msra.mxu0 0.0
      %1208 = vmatprep.subr.mxu0 0.0
      %1209 = vmatpush1.msra.mxu0 0.0
      %1210 = vmatprep.subr.mxu0 0.0
      %1211 = vmatpush1.msra.mxu0 0.0
      %1212 = vmatprep.subr.mxu0 0.0
      %1213 = vmatpush1.msra.mxu0 0.0
      %1214 = vmatprep.subr.mxu0 0.0
      %1215 = vmatpush1.msra.mxu0 0.0
      %1216 = vmatprep.subr.mxu0 0.0
      %1217 = vmatpush1.msra.mxu0 0.0
      %1218 = vmatprep.subr.mxu0 0.0
      %1219 = vmatpush1.msra.mxu0 0.0
      %1220 = vmatprep.subr.mxu0 0.0
      %1221 = vmatpush1.msra.mxu0 0.0
      %1222 = vmatprep.subr.mxu0 0.0
      %1223 = vmatpush1.msra.mxu0 0.0
      %1224 = vmatprep.subr.mxu0 0.0
      %1225 = vmatpush1.msra.mxu0 0.0
      %1226 = vmatprep.subr.mxu0 0.0
      %1227 = vmatpush1.msra.mxu0 0.0
      %1228 = vmatprep.subr.mxu0 0.0
      %1229 = vmatpush1.msra.mxu0 0.0
      %1230 = vmatprep.subr.mxu0 0.0
      %1231 = vmatpush1.msra.mxu0 0.0
      %1232 = vmatprep.subr.mxu0 0.0
      %1233 = vmatpush1.msra.mxu0 0.0
      %1234 = vmatprep.subr.mxu0 0.0
      %1235 = vmatpush1.msra.mxu0 0.0
      %1236 = vmatprep.subr.mxu0 0.0
      %1237 = vmatpush1.msra.mxu0 0.0
      %1238 = vmatprep.subr.mxu0 0.0
      %1239 = vmatpush1.msra.mxu0 0.0
      %1240 = vmatprep.subr.mxu0 0.0
      %1241 = vmatpush1.msra.mxu0 0.0
      %1242 = vmatprep.subr.mxu0 0.0
      %1243 = vmatpush1.msra.mxu0 0.0
      %1244 = vmatprep.subr.mxu0 0.0
      %1245 = vmatpush1.msra.mxu0 0.0
      %1246 = vmatprep.subr.mxu0 0.0
      %1247 = vmatpush1.msra.mxu0 0.0
      %1248 = vmatprep.mubr.f32.mxu0 0.0
      %1249 = vmatmul.mubr.f32.gmra.mrb[0].mxu0 %v1179
      %v1250 = vpop.f32.mrb[0].mxu0
      %v1251 = vadd.f32 0.0, %v1250
      %v1252 = vpop.f32.mrb[0].mxu0
      %1253 = vdwg.mxu0
      %v1254 = vsub.f32 %v415, %v1023
      %v1255 = vsub.f32 %v491, %v1099
      %v1256 = vsub.f32 %v567, %v1175
      %v1257 = vsub.f32 %v643, %v1251
      %v1258 = vadd.f32 %v415, %v719
      %v1259 = vadd.f32 %v491, %v795
      %v1260 = vadd.f32 %v567, %v871
      %v1261 = vadd.f32 %v643, %v947
      %1266 = vrot.lane.b32.xlu0 %v1258, 4
      %v1267 = vpop.permute.xlu0 %1266
      %1268 = vrot.lane.b32.xlu0 %v1259, 4
      %v1269 = vpop.permute.xlu0 %1268
      %1270 = vrot.lane.b32.xlu0 %v1260, 4
      %v1271 = vpop.permute.xlu0 %1270
      %1272 = vrot.lane.b32.xlu0 %v1261, 4
      %v1273 = vpop.permute.xlu0 %1272
      %v1278 = vsel %vm340, %v1254, %v1267
      %v1279 = vsel %vm340, %v1255, %v1269
      %v1280 = vsel %vm340, %v1256, %v1271
      %v1281 = vsel %vm340, %v1257, %v1273
      %vm1282 = vcmask 58368
      %1283 = vst.msk [vmem:[%s314] sm:$0x3] %vm1282, %v1278
      %1284 = vst.msk [vmem:[%s314 + $0x2] sm:$0x3] %vm1282, %v1279
      %1285 = vst.msk [vmem:[%s314 + $0x4] sm:$0x3] %vm1282, %v1280
      %1286 = vst.msk [vmem:[%s314 + $0x6] sm:$0x3] %vm1282, %v1281
      %s1287 = smul.u32 4, %s16
      %p1288 = scmp.lt.s32.totalorder %s1287, 7
      %s1289 = scalar_select %p1288, %s1287, 7
      %s1290 = smul.addr %s1289, 2
      %s1291 = scalar_lea.vmem %s5, %s1290
      // Predicated region
      $region41: #{spectral_conv1d.1} parent=39 // pred_check
        %p1292 = pneg %p164
      $region42: #{spectral_conv1d.1} parent=39 // pred_check_branch
        %1294 = sbr.rel (%p1292) target = $region44
      $region43: #{spectral_conv1d.1} parent=39 // pred_region
        %s1295 = smul.u32 4, %s16
      $region44: #{spectral_conv1d.1} parent=39 // pred_fallthru
        _
    $region40: #{spectral_conv1d.1} parent=5 // pred_fallthru
      _
    %p1296 = scmp.le.s32.totalorder 2, %s11
    // Predicated region
    $region45: #{spectral_conv1d.1} parent=5 // pred_check
      %p1297 = pneg %p1296
    $region46: #{spectral_conv1d.1} parent=5 // pred_check_branch
      %1299 = sbr.rel (%p1297) target = $region48
    $region47: #{spectral_conv1d.1} parent=5 // pred_region
      %s1300 = ssub.s32 %s11, 2
      // Predicated region
      $region49: #{spectral_conv1d.1} parent=47 // pred_check
        %p1301 = pneg %p170
      $region50: #{spectral_conv1d.1} parent=47 // pred_check_branch
        %1303 = sbr.rel (%p1301) target = $region52
      $region51: #{spectral_conv1d.1} parent=47 // pred_region
        %s1304 = smul.u32 4, %s17
        %p1305 = scmp.lt.s32.totalorder %s1304, 7
        %s1306 = scalar_select %p1305, %s1304, 7
        %s1307 = smul.addr %s1306, 2
        %s1308 = scalar_lea.vmem %s5, %s1307
      $region52: #{spectral_conv1d.1} parent=47 // pred_fallthru
        _
    $region48: #{spectral_conv1d.1} parent=5 // pred_fallthru
      _
  $region6: #{spectral_conv1d.1} parent=0 // loop_footer
    %s15 = sadd.s32 1, %s11
  $region7: #{spectral_conv1d.1} parent=0 // loop_footer_branch
    %10 = sbr.rel target = $region3
  $region8: #{spectral_conv1d.1} parent=0 // loop_exit
    _

</llo_original>
